<compile_context>
chip_gen: v5e
topology: v5e:2x2
jax: 0.10.0
libtpu: 0.0.40
codegen_flags: <defaults>
</compile_context>

<pallas_src>
import functools

import jax
import jax.numpy as jnp
from jax.experimental import pallas as pl
from jax.experimental.pallas import tpu as pltpu


VMEM_LIMIT = 64 * 1024 * 1024  # bytes; blocks here are tiny, this just gives headroom.


def _compiler_params(n_axes=1):
    return pltpu.CompilerParams(
        dimension_semantics=("parallel",) * n_axes,
        vmem_limit_bytes=VMEM_LIMIT,
    )


def _choose_tile_m(m):
    """Pick an M tile that divides M exactly (keeps BlockSpecs simple & writes unmasked)."""
    if m <= 256:
        return m
    for t in (256, 128, 64, 32, 16, 8):
        if m % t == 0:
            return t
    return m  # fallback: single full block


# ----------------------------- Pallas kernels -----------------------------

def _mm_bn_act_kernel(a_ref, w_ref, s_ref, b_ref, *rest, relu, has_res):
    # out = relu((A @ W) * scale + bias [+ residual])   -- A, W are bf16; accumulate in f32.
    if has_res:
        r_ref, o_ref = rest
    else:
        (o_ref,) = rest
    acc = jnp.dot(a_ref[...], w_ref[...], preferred_element_type=jnp.float32)
    acc = acc * s_ref[...] + b_ref[...]
    if has_res:
        acc = acc + r_ref[...]
    if relu:
        acc = jnp.maximum(acc, 0.0)
    o_ref[...] = acc


def _conv3x3_s1_kernel(x_ref, w_ref, s_ref, b_ref, *rest, wp, hwp, relu, has_res):
    # Direct 3x3 stride-1 conv for one image: input is the zero-padded image flattened to
    # rows (Hp*Wp, Cin) resident in VMEM; accumulate the 9 shifted tap-GEMMs on the MXU.
    if has_res:
        r_ref, o_ref = rest
    else:
        (o_ref,) = rest
    acc = None
    for di in range(3):
        for dj in range(3):
            start = di * wp + dj                       # static offset
            a = x_ref[pl.ds(start, hwp), :].astype(jnp.bfloat16)
            t = jnp.dot(a, w_ref[di * 3 + dj], preferred_element_type=jnp.float32)
            acc = t if acc is None else acc + t
    acc = acc * s_ref[...] + b_ref[...]
    if has_res:
        acc = acc + r_ref[...]
    if relu:
        acc = jnp.maximum(acc, 0.0)
    o_ref[...] = acc


def _make_sum_relu_kernel(n_terms):
    def kern(*refs):
        o_ref = refs[n_terms]
        acc = refs[0][...]
        for j in range(1, n_terms):
            acc = acc + refs[j][...]
        o_ref[...] = jnp.maximum(acc, 0.0)
    return kern


# ----------------------------- Pallas wrappers -----------------------------

def pallas_matmul_bn_act(a, w, scale, bias, residual=None, relu=True):
    m, k = a.shape
    n = w.shape[1]
    tm = _choose_tile_m(m)
    gm = m // tm

    a16 = a.astype(jnp.bfloat16)
    w16 = w.astype(jnp.bfloat16)
    s2 = scale.reshape(1, n).astype(jnp.float32)
    b2 = bias.reshape(1, n).astype(jnp.float32)

    args = [a16, w16, s2, b2]
    in_specs = [
        pl.BlockSpec((tm, k), lambda i: (i, 0)),
        pl.BlockSpec((k, n), lambda i: (0, 0)),     # constant -> VMEM-resident across M steps
        pl.BlockSpec((1, n), lambda i: (0, 0)),
        pl.BlockSpec((1, n), lambda i: (0, 0)),
    ]
    has_res = residual is not None
    if has_res:
        args.append(residual.astype(jnp.float32))
        in_specs.append(pl.BlockSpec((tm, n), lambda i: (i, 0)))

    kern = functools.partial(_mm_bn_act_kernel, relu=relu, has_res=has_res)
    return pl.pallas_call(
        kern,
        out_shape=jax.ShapeDtypeStruct((m, n), jnp.float32),
        grid=(gm,),
        in_specs=in_specs,
        out_specs=pl.BlockSpec((tm, n), lambda i: (i, 0)),
        compiler_params=_compiler_params(1),
    )(*args)


def conv3x3_s1_direct(x, wgt, scale, bias, relu=True, residual=None):
    """3x3, stride 1, pad 1 conv + BN (+residual, +ReLU) without HBM im2col expansion."""
    n, h, wd, cin = x.shape
    cout = wgt.shape[-1]
    wp = wd + 2
    hwp = h * wp
    mp = (h + 2) * wp + 8    # + slack rows so every static tap slice stays in bounds

    xp = jnp.pad(x, ((0, 0), (1, 1), (1, 1), (0, 0))).reshape(n, (h + 2) * wp, cin)
    xp = jnp.pad(xp, ((0, 0), (0, 8), (0, 0)))                 # f32 (aligned, safe slicing)
    w9 = wgt.reshape(9, cin, cout).astype(jnp.bfloat16)
    s2 = scale.reshape(1, cout).astype(jnp.float32)
    b2 = bias.reshape(1, cout).astype(jnp.float32)

    args = [xp, w9, s2, b2]
    in_specs = [
        pl.BlockSpec((None, mp, cin), lambda i: (i, 0, 0)),
        pl.BlockSpec((9, cin, cout), lambda i: (0, 0, 0)),
        pl.BlockSpec((1, cout), lambda i: (0, 0)),
        pl.BlockSpec((1, cout), lambda i: (0, 0)),
    ]
    has_res = residual is not None
    if has_res:
        rp = jnp.pad(residual, ((0, 0), (0, 0), (0, 2), (0, 0))).reshape(n, hwp, cout)
        args.append(rp.astype(jnp.float32))
        in_specs.append(pl.BlockSpec((None, hwp, cout), lambda i: (i, 0, 0)))

    kern = functools.partial(_conv3x3_s1_kernel, wp=wp, hwp=hwp, relu=relu, has_res=has_res)
    out = pl.pallas_call(
        kern,
        out_shape=jax.ShapeDtypeStruct((n, hwp, cout), jnp.float32),
        grid=(n,),
        in_specs=in_specs,
        out_specs=pl.BlockSpec((None, hwp, cout), lambda i: (i, 0, 0)),
        compiler_params=_compiler_params(1),
    )(*args)
    # crop the 2 garbage columns per row produced by the padded-width layout
    return out.reshape(n, h, wp, cout)[:, :, :wd, :]


def pallas_sum_relu(terms):
    n, h, w, c = terms[0].shape
    m = n * h * w
    flats = [t.reshape(m, c).astype(jnp.float32) for t in terms]
    j = len(flats)
    tm = _choose_tile_m(m)
    gm = m // tm
    spec = pl.BlockSpec((tm, c), lambda i: (i, 0))
    out = pl.pallas_call(
        _make_sum_relu_kernel(j),
        out_shape=jax.ShapeDtypeStruct((m, c), jnp.float32),
        grid=(gm,),
        in_specs=[spec] * j,
        out_specs=spec,
        compiler_params=_compiler_params(1),
    )(*flats)
    return out.reshape(n, h, w, c)


# ----------------------------- conv / resize glue -----------------------------

def _im2col(x, k, stride, pad):
    n, h, w, c = x.shape
    xp = jnp.pad(x, ((0, 0), (pad, pad), (pad, pad), (0, 0)))
    ho = (h + 2 * pad - k) // stride + 1
    wo = (w + 2 * pad - k) // stride + 1
    cols = []
    for di in range(k):
        for dj in range(k):
            cols.append(xp[:, di:di + stride * ho:stride, dj:dj + stride * wo:stride, :])
    patches = jnp.concatenate(cols, axis=-1)
    return patches.reshape(n * ho * wo, k * k * c), (n, ho, wo)


def conv_bn_act(x, w, scale, bias, stride=1, relu=True, residual=None):
    """conv2d (pad=k//2, no conv-bias) folded with BN scale/bias, optional residual add, ReLU."""
    kh, kw, cin, cout = w.shape
    if kh == 3 and stride == 1:
        # hot path: direct tap-accumulating conv kernel (no HBM im2col)
        return conv3x3_s1_direct(x, w, scale, bias, relu=relu, residual=residual)
    # TODO(synk): stride-2 3x3 convs still use HBM-materialized im2col patches (9x expansion);
    #             they are a small fraction of the network.
    pad = kh // 2
    patches, (n, ho, wo) = _im2col(x, kh, stride, pad)
    wmat = w.reshape(kh * kw * cin, cout)
    res = residual.reshape(n * ho * wo, cout) if residual is not None else None
    out = pallas_matmul_bn_act(patches, wmat, scale, bias, residual=res, relu=relu)
    return out.reshape(n, ho, wo, cout)


def bilinear_resize(x, oh, ow, align_corners):
    """Matches torch.nn.functional.interpolate(mode='bilinear')."""
    # TODO(synk): remains a plain-JAX gather; not fused with the preceding 1x1 conv kernel.
    n, h, w, c = x.shape

    def coords(o, i_sz):
        idx = jnp.arange(o, dtype=jnp.float32)
        if align_corners:
            scl = (i_sz - 1) / (o - 1) if o > 1 else 0.0
            src = idx * scl
        else:
            src = (idx + 0.5) * (i_sz / o) - 0.5
            src = jnp.clip(src, 0.0, float(i_sz - 1))
        lo = jnp.clip(jnp.floor(src).astype(jnp.int32), 0, i_sz - 1)
        hi = jnp.minimum(lo + 1, i_sz - 1)
        frac = src - lo.astype(jnp.float32)
        return lo, hi, frac

    h0, h1, fh = coords(oh, h)
    w0, w1, fw = coords(ow, w)
    top0 = x[:, h0, :, :]
    bot0 = x[:, h1, :, :]

    def gather_w(t):
        a = t[:, :, w0, :]
        b = t[:, :, w1, :]
        return a * (1.0 - fw)[None, None, :, None] + b * fw[None, None, :, None]

    top = gather_w(top0)
    bot = gather_w(bot0)
    return top * (1.0 - fh)[None, :, None, None] + bot * fh[None, :, None, None]


# ----------------------------- parameters (deterministic, synthetic) -----------------------------

BLOCK_EXPANSION = {'BASIC': 1, 'BOTTLENECK': 4}
BN_EPS = 1e-5


class ParamFactory:
    def __init__(self, seed=0):
        self._key = jax.random.PRNGKey(seed)

    def _next(self):
        self._key, sub = jax.random.split(self._key)
        return sub

    def conv(self, k, cin, cout):
        return 0.05 * jax.random.normal(self._next(), (k, k, cin, cout), dtype=jnp.float32)

    def bias(self, c):
        return 0.02 * jax.random.normal(self._next(), (c,), dtype=jnp.float32)

    def bn(self, c):
        # inference-mode BN folded into (scale, bias)
        gamma = 1.0 + 0.05 * jax.random.normal(self._next(), (c,), dtype=jnp.float32)
        beta = 0.02 * jax.random.normal(self._next(), (c,), dtype=jnp.float32)
        mean = 0.02 * jax.random.normal(self._next(), (c,), dtype=jnp.float32)
        var = 1.0 + 0.05 * jax.random.uniform(self._next(), (c,), dtype=jnp.float32)
        scale = gamma * jax.lax.rsqrt(var + BN_EPS)
        bias = beta - mean * scale
        return (scale, bias)


def make_block(pf, block_type, inplanes, planes, stride=1, with_downsample=False):
    exp = BLOCK_EXPANSION[block_type]
    p = {'type': block_type, 'stride': stride, 'downsample': None}
    if block_type == 'BASIC':
        p['conv1'] = pf.conv(3, inplanes, planes); p['bn1'] = pf.bn(planes)
        p['conv2'] = pf.conv(3, planes, planes);   p['bn2'] = pf.bn(planes)
    else:  # BOTTLENECK
        p['conv1'] = pf.conv(1, inplanes, planes);       p['bn1'] = pf.bn(planes)
        p['conv2'] = pf.conv(3, planes, planes);         p['bn2'] = pf.bn(planes)
        p['conv3'] = pf.conv(1, planes, planes * exp);   p['bn3'] = pf.bn(planes * exp)
    if with_downsample:
        p['downsample'] = {'w': pf.conv(1, inplanes, planes * exp), 'bn': pf.bn(planes * exp)}
    return p


def make_layer(pf, block_type, inplanes, planes, num_blocks, stride=1):
    exp = BLOCK_EXPANSION[block_type]
    wd = (stride != 1) or (inplanes != planes * exp)
    blocks = [make_block(pf, block_type, inplanes, planes, stride, wd)]
    inplanes = planes * exp
    for _ in range(1, num_blocks):
        blocks.append(make_block(pf, block_type, inplanes, planes))
    return blocks, inplanes


def make_transition(pf, pre, cur):
    layers = []
    for i in range(len(cur)):
        if i < len(pre):
            if cur[i] != pre[i]:
                layers.append([{'w': pf.conv(3, pre[i], cur[i]), 'bn': pf.bn(cur[i]), 'stride': 1}])
            else:
                layers.append(None)
        else:
            convs = []
            for j in range(i + 1 - len(pre)):
                inc = pre[-1]
                outc = cur[i] if j == i - len(pre) else inc
                convs.append({'w': pf.conv(3, inc, outc), 'bn': pf.bn(outc), 'stride': 2})
            layers.append(convs)
    return layers


def make_hr_module(pf, num_branches, block_type, num_blocks, num_inchannels, num_channels,
                   multi_scale_output=True):
    exp = BLOCK_EXPANSION[block_type]
    ninch = list(num_inchannels)
    branches = []
    for i in range(num_branches):
        blocks = []
        inpl = ninch[i]
        planes = num_channels[i]
        wd = (inpl != planes * exp)
        blocks.append(make_block(pf, block_type, inpl, planes, stride=1, with_downsample=wd))
        ninch[i] = planes * exp
        for _ in range(1, num_blocks[i]):
            blocks.append(make_block(pf, block_type, ninch[i], planes))
        branches.append(blocks)
    fuse = []
    if num_branches > 1:
        for i in range(num_branches if multi_scale_output else 1):
            row = []
            for j in range(num_branches):
                if j > i:
                    row.append({'kind': 'up', 'w': pf.conv(1, ninch[j], ninch[i]), 'bn': pf.bn(ninch[i])})
                elif j == i:
                    row.append(None)
                else:
                    convs = []
                    for k in range(i - j):
                        if k == i - j - 1:
                            outc = ninch[i]
                            convs.append({'w': pf.conv(3, ninch[j], outc), 'bn': pf.bn(outc), 'relu': False})
                        else:
                            outc = ninch[j]
                            convs.append({'w': pf.conv(3, ninch[j], outc), 'bn': pf.bn(outc), 'relu': True})
                    row.append({'kind': 'down', 'convs': convs})
            fuse.append(row)
    return {'branches': branches, 'fuse': fuse, 'ninch': ninch}


def make_stage(pf, scfg, num_inchannels, multi_scale_output=True):
    modules = []
    ninch = list(num_inchannels)
    for m in range(scfg['NUM_MODULES']):
        if not multi_scale_output and m == scfg['NUM_MODULES'] - 1:
            mso = False
        else:
            mso = True
        mod = make_hr_module(pf, scfg['NUM_BRANCHES'], scfg['BLOCK'], scfg['NUM_BLOCKS'],
                             ninch, scfg['NUM_CHANNELS'], multi_scale_output=mso)
        ninch = mod['ninch']
        modules.append(mod)
    return modules, ninch


def build_hrnet_params(cfg, num_classes, seed=0):
    pf = ParamFactory(seed)
    params = {}
    params['stem_conv1'] = pf.conv(3, 3, 64);  params['stem_bn1'] = pf.bn(64)
    params['stem_conv2'] = pf.conv(3, 64, 64); params['stem_bn2'] = pf.bn(64)

    s1 = cfg['STAGE1']
    params['layer1'], stage1_out = make_layer(pf, s1['BLOCK'], 64, s1['NUM_CHANNELS'][0],
                                              s1['NUM_BLOCKS'][0])

    s2 = cfg['STAGE2']
    ch2 = [c * BLOCK_EXPANSION[s2['BLOCK']] for c in s2['NUM_CHANNELS']]
    params['transition1'] = make_transition(pf, [stage1_out], ch2)
    params['stage2'], pre = make_stage(pf, s2, ch2)

    s3 = cfg['STAGE3']
    ch3 = [c * BLOCK_EXPANSION[s3['BLOCK']] for c in s3['NUM_CHANNELS']]
    params['transition2'] = make_transition(pf, pre, ch3)
    params['stage3'], pre = make_stage(pf, s3, ch3)

    s4 = cfg['STAGE4']
    ch4 = [c * BLOCK_EXPANSION[s4['BLOCK']] for c in s4['NUM_CHANNELS']]
    params['transition3'] = make_transition(pf, pre, ch4)
    params['stage4'], pre = make_stage(pf, s4, ch4, multi_scale_output=True)

    last_inp = int(sum(pre))
    fk = cfg['FINAL_CONV_KERNEL']
    params['last'] = {
        'conv1_w': pf.conv(1, last_inp, last_inp),
        'conv1_b': pf.bias(last_inp),
        'bn': pf.bn(last_inp),
        'conv2_w': pf.conv(fk, last_inp, num_classes),
        'conv2_b': pf.bias(num_classes),
    }
    return params


# ----------------------------- forward pass -----------------------------

def block_fwd(p, x):
    if p['downsample'] is not None:
        ds = p['downsample']
        residual = conv_bn_act(x, ds['w'], ds['bn'][0], ds['bn'][1],
                               stride=p['stride'], relu=False)
    else:
        residual = x
    if p['type'] == 'BASIC':
        out = conv_bn_act(x, p['conv1'], p['bn1'][0], p['bn1'][1], stride=p['stride'], relu=True)
        out = conv_bn_act(out, p['conv2'], p['bn2'][0], p['bn2'][1], stride=1, relu=True,
                          residual=residual)
    else:  # BOTTLENECK
        out = conv_bn_act(x, p['conv1'], p['bn1'][0], p['bn1'][1], stride=1, relu=True)
        out = conv_bn_act(out, p['conv2'], p['bn2'][0], p['bn2'][1], stride=p['stride'], relu=True)
        out = conv_bn_act(out, p['conv3'], p['bn3'][0], p['bn3'][1], stride=1, relu=True,
                          residual=residual)
    return out


def branch_fwd(blocks, x):
    for b in blocks:
        x = block_fwd(b, x)
    return x


def apply_transition(layers, x):
    for c in layers:
        x = conv_bn_act(x, c['w'], c['bn'][0], c['bn'][1], stride=c['stride'], relu=True)
    return x


def apply_down(entry, x):
    for c in entry['convs']:
        x = conv_bn_act(x, c['w'], c['bn'][0], c['bn'][1], stride=2, relu=c['relu'])
    return x


def hr_module_fwd(p, xs):
    nb = len(p['branches'])
    xs = [branch_fwd(p['branches'][i], xs[i]) for i in range(nb)]
    if nb == 1:
        return xs
    outs = []
    for i in range(len(p['fuse'])):
        th, tw = xs[i].shape[1], xs[i].shape[2]
        terms = []
        for j in range(nb):
            if j == i:
                terms.append(xs[j])
            elif j > i:
                e = p['fuse'][i][j]
                z = conv_bn_act(xs[j], e['w'], e['bn'][0], e['bn'][1], stride=1, relu=False)
                z = bilinear_resize(z, th, tw, align_corners=False)
                terms.append(z)
            else:
                terms.append(apply_down(p['fuse'][i][j], xs[j]))
        # TODO(synk): the downsample-path sums could be chained through the conv residual input
        #             to skip this reduction kernel entirely; kept separate for clarity.
        outs.append(pallas_sum_relu(terms))
    return outs


def stage_fwd(modules, xs):
    for m in modules:
        xs = hr_module_fwd(m, xs)
    return xs


def hrnet_forward(params, cfg, x_nchw):
    # NCHW (PyTorch) -> NHWC (kernel layout)
    x = jnp.transpose(x_nchw, (0, 2, 3, 1)).astype(jnp.float32)

    x = conv_bn_act(x, params['stem_conv1'], params['stem_bn1'][0], params['stem_bn1'][1],
                    stride=2, relu=True)
    x = conv_bn_act(x, params['stem_conv2'], params['stem_bn2'][0], params['stem_bn2'][1],
                    stride=2, relu=True)
    for b in params['layer1']:
        x = block_fwd(b, x)

    x_list = []
    for i in range(cfg['STAGE2']['NUM_BRANCHES']):
        t = params['transition1'][i]
        x_list.append(apply_transition(t, x) if t is not None else x)
    y_list = stage_fwd(params['stage2'], x_list)

    x_list = []
    for i in range(cfg['STAGE3']['NUM_BRANCHES']):
        t = params['transition2'][i]
        x_list.append(apply_transition(t, y_list[-1]) if t is not None else y_list[i])
    y_list = stage_fwd(params['stage3'], x_list)

    x_list = []
    for i in range(cfg['STAGE4']['NUM_BRANCHES']):
        t = params['transition3'][i]
        x_list.append(apply_transition(t, y_list[-1]) if t is not None else y_list[i])
    ys = stage_fwd(params['stage4'], x_list)

    hrnet_seg_x_list = [jnp.transpose(t, (0, 3, 1, 2)) for t in ys]  # NCHW, like PyTorch

    h0, w0 = ys[0].shape[1], ys[0].shape[2]
    ups = [ys[0]] + [bilinear_resize(ys[k], h0, w0, align_corners=True) for k in range(1, len(ys))]
    cat = jnp.concatenate(ups, axis=-1)

    last = params['last']
    s_bn, b_bn = last['bn']
    # 1x1 conv (with bias) folded with BN + ReLU
    z = conv_bn_act(cat, last['conv1_w'], s_bn, last['conv1_b'] * s_bn + b_bn, stride=1, relu=True)
    nclasses = last['conv2_w'].shape[-1]
    out = conv_bn_act(z, last['conv2_w'], jnp.ones((nclasses,), jnp.float32), last['conv2_b'],
                      stride=1, relu=False)
    return jnp.transpose(out, (0, 3, 1, 2)), hrnet_seg_x_list


# ----------------------------- config & main -----------------------------

CFG = {
    'STAGE1': dict(NUM_MODULES=1, NUM_BRANCHES=1, BLOCK='BOTTLENECK',
                   NUM_BLOCKS=[1], NUM_CHANNELS=[8], FUSE_METHOD='SUM'),
    'STAGE2': dict(NUM_MODULES=1, NUM_BRANCHES=2, BLOCK='BASIC',
                   NUM_BLOCKS=[1, 1], NUM_CHANNELS=[8, 16], FUSE_METHOD='SUM'),
    'STAGE3': dict(NUM_MODULES=1, NUM_BRANCHES=3, BLOCK='BASIC',
                   NUM_BLOCKS=[1, 1, 1], NUM_CHANNELS=[8, 16, 32], FUSE_METHOD='SUM'),
    'STAGE4': dict(NUM_MODULES=1, NUM_BRANCHES=4, BLOCK='BASIC',
                   NUM_BLOCKS=[1, 1, 1, 1], NUM_CHANNELS=[8, 16, 32, 64], FUSE_METHOD='SUM'),
    'FINAL_CONV_KERNEL': 1,
}
NUM_CLASSES = 5

# TODO(synk): BatchNorm runs in inference mode (folded running stats); PyTorch train-mode batch
#             stats are not reproduced.  Per-branch convs are still issued as separate
#             pallas_calls (not batched via a branch grid axis) and outputs with Cout<128 keep
#             masked narrow stores (no transposed/lane-packed output layout).

if __name__ == "__main__":
    params = build_hrnet_params(CFG, NUM_CLASSES, seed=0)

    key = jax.random.PRNGKey(0)
    x = jax.random.normal(key, (2, 3, 64, 64), dtype=jnp.float32)  # NCHW, like torch input

    out, seg_list = hrnet_forward(params, CFG, x)
    out = jax.block_until_ready(out)
    for t in seg_list:
        jax.block_until_ready(t)

    assert out.shape == (2, NUM_CLASSES, 16, 16), out.shape
    assert [tuple(t.shape) for t in seg_list] == [
        (2, 8, 16, 16), (2, 16, 8, 8), (2, 32, 4, 4), (2, 64, 2, 2)]
    assert jnp.all(jnp.isfinite(out))
    print("KERNEL_OK")
</pallas_src>

<mosaic_0001>
module attributes {stable_mosaic.version = 11 : i64} {
  func.func @_mm_bn_act_kernel(%arg0: i32, %arg1: memref<256x27xbf16, #tpu.memory_space<vmem>>, %arg2: memref<27x64xbf16, #tpu.memory_space<vmem>>, %arg3: memref<1x64xf32, #tpu.memory_space<vmem>>, %arg4: memref<1x64xf32, #tpu.memory_space<vmem>>, %arg5: memref<256x64xf32, #tpu.memory_space<vmem>>) attributes {dimension_semantics = [#tpu.dimension_semantics<parallel>], iteration_bounds = array<i64: 8>, scalar_prefetch = 0 : i64, scratch_operands = 0 : i64, tpu.core_type = #tpu.core_type<tc>, window_params = [{transform_indices = @transform_0, window_bounds = array<i64: 256, 27>}, {pipeline_mode = #tpu.pipeline_mode<synchronous>, transform_indices = @transform_1, window_bounds = array<i64: 27, 64>}, {pipeline_mode = #tpu.pipeline_mode<synchronous>, transform_indices = @transform_2, window_bounds = array<i64: 1, 64>}, {pipeline_mode = #tpu.pipeline_mode<synchronous>, transform_indices = @transform_3, window_bounds = array<i64: 1, 64>}, {transform_indices = @transform_4, window_bounds = array<i64: 256, 64>}]} {
    %c0 = arith.constant 0 : index
    %c0_0 = arith.constant 0 : index
    %0 = vector.load %arg1[%c0, %c0_0] : memref<256x27xbf16, #tpu.memory_space<vmem>>, vector<256x27xbf16>
    %c0_1 = arith.constant 0 : index
    %c0_2 = arith.constant 0 : index
    %1 = vector.load %arg2[%c0_1, %c0_2] : memref<27x64xbf16, #tpu.memory_space<vmem>>, vector<27x64xbf16>
    %cst = arith.constant dense<0.000000e+00> : vector<256x64xf32>
    %2 = tpu.matmul %0, %1, %cst {dimension_numbers = #tpu.dot_dimension_numbers<[1], [0], [0], [1], [0, 0, 1, 1], [], []>} : vector<256x27xbf16>, vector<27x64xbf16>, vector<256x64xf32> -> vector<256x64xf32>
    %c0_3 = arith.constant 0 : index
    %c0_4 = arith.constant 0 : index
    %3 = vector.load %arg3[%c0_3, %c0_4] : memref<1x64xf32, #tpu.memory_space<vmem>>, vector<1x64xf32>
    %4 = vector.broadcast %3 : vector<1x64xf32> to vector<256x64xf32>
    %5 = arith.mulf %2, %4 : vector<256x64xf32>
    %c0_5 = arith.constant 0 : index
    %c0_6 = arith.constant 0 : index
    %6 = vector.load %arg4[%c0_5, %c0_6] : memref<1x64xf32, #tpu.memory_space<vmem>>, vector<1x64xf32>
    %7 = vector.broadcast %6 : vector<1x64xf32> to vector<256x64xf32>
    %8 = arith.addf %5, %7 : vector<256x64xf32>
    %cst_7 = arith.constant 0.000000e+00 : f32
    %9 = vector.broadcast %cst_7 : f32 to vector<256x64xf32>
    %10 = arith.maximumf %8, %9 : vector<256x64xf32>
    %c0_8 = arith.constant 0 : index
    %c0_9 = arith.constant 0 : index
    %11 = vector.load %arg5[%c0_8, %c0_9] : memref<256x64xf32, #tpu.memory_space<vmem>>, vector<256x64xf32>
    tpu.vector_store %arg5[%c0_8, %c0_9], %10 {strides = array<i32>} : memref<256x64xf32, #tpu.memory_space<vmem>>, vector<256x64xf32>,
    return
  }
  func.func @transform_0(%arg0: i32) -> (i32, i32) {
    %c0_i32 = arith.constant 0 : i32
    %c0_i32_0 = arith.constant 0 : i32
    return %arg0, %c0_i32 : i32, i32
  }
  func.func @transform_1(%arg0: i32) -> (i32, i32) {
    %c0_i32 = arith.constant 0 : i32
    %c0_i32_0 = arith.constant 0 : i32
    %c0_i32_1 = arith.constant 0 : i32
    return %c0_i32, %c0_i32_0 : i32, i32
  }
  func.func @transform_2(%arg0: i32) -> (i32, i32) {
    %c0_i32 = arith.constant 0 : i32
    %c0_i32_0 = arith.constant 0 : i32
    %c0_i32_1 = arith.constant 0 : i32
    return %c0_i32, %c0_i32_0 : i32, i32
  }
  func.func @transform_3(%arg0: i32) -> (i32, i32) {
    %c0_i32 = arith.constant 0 : i32
    %c0_i32_0 = arith.constant 0 : i32
    %c0_i32_1 = arith.constant 0 : i32
    return %c0_i32, %c0_i32_0 : i32, i32
  }
  func.func @transform_4(%arg0: i32) -> (i32, i32) {
    %c0_i32 = arith.constant 0 : i32
    %c0_i32_0 = arith.constant 0 : i32
    return %arg0, %c0_i32 : i32, i32
  }
}

</mosaic_0001>

<llo_original>
// kernel: tpu_custom_call.1
$region0: #{tpu_custom_call.1}
  #allocation0 [shape = 'u32[]', space=smem, size = 0x4, offset = 0x4, fixed_abs, tag = 'smem constant byte address 0x4 - core index']
  #allocation1 [shape = 'u32[72,128]{1,0:T(1,128)}', space=vmem, size = 0x9000, scoped, tag = 'internal scratch']
  %s0 = inlined_call_operand.vmem [shape: bf16[2048,27], index: 0, kind: input, shape index: {}]
  %s1 = inlined_call_operand.vmem [shape: bf16[27,64], index: 1, kind: input, shape index: {}]
  %s2 = inlined_call_operand.vmem [shape: f32[1,64], index: 2, kind: input, shape index: {}]
  %s3 = inlined_call_operand.vmem [shape: f32[1,64], index: 3, kind: input, shape index: {}]
  %s4 = inlined_call_operand.vmem [shape: f32[2048,64], index: 4, kind: output, shape index: {}]
  %s5 = sld [smem:[#allocation0]]
  $region49: #{tpu_custom_call.1} parent=0
    _
  %s7 = ssub.s32 1, %s5
  %s8 = scalar_select 0, %s7, %s5
  loop: start=0, step=1, limit=10
  $region2: #{tpu_custom_call.1} parent=0 // loop_pre_header
    _
  $region3: #{tpu_custom_call.1} parent=0 // loop_header
    %s10 = sphi 0, %s14
    %p11 = scmp.ge.s32.totalorder %s10, 10
    %s20 = sphi 0, %s22
    %s23 = sphi 0, %s20
    %s24 = sphi 0, %s23
    %s40 = sphi 0, %s24
    %s44 = sphi 0, %s44
    %s46 = sphi 0, %s44
    %s47 = sphi 0, %s46
    %s61 = sphi 0, %s47
    %s65 = sphi 0, %s65
    %s67 = sphi 0, %s65
    %s68 = sphi 0, %s67
    %s82 = sphi 0, %s68
    %s86 = sphi 0, %s86
    %s88 = sphi 0, %s86
    %s89 = sphi 0, %s88
    %s103 = sphi 0, %s89
    %s109 = sphi 0, %s111
    %s112 = sphi 0, %s109
    %s113 = sphi 0, %s112
    %s129 = sphi 0, %s113
  $region4: #{tpu_custom_call.1} parent=0 // loop_header_branch
    %13 = sbr.rel (%p11) target = $region8
  $region5: #{tpu_custom_call.1} parent=0 // loop_body
    %s15 = ssub.s32 %s10, 1
    %s16 = ssub.s32 %s10, 2
    %s17 = sadd.s32 %s10, 1
    %s18 = ssub.s32 %s10, %s17
    %p19 = scmp.eq.s32.totalorder %s18, 0
    %s21 = sadd.s32 %s20, 1
    %s22 = scalar_select %p19, %s20, %s21
    %p25 = pneg %p19
    %p26 = scmp.eq.s32.totalorder %s10, 7
    %p27 = por %p25, %p26
    %p28 = scmp.ne.s32.totalorder %s20, %s23
    %p29 = scmp.eq.s32.totalorder %s10, 0
    %p30 = por %p28, %p29
    %p31 = scmp.ne.s32.totalorder %s20, %s23
    %p32 = scmp.eq.s32.totalorder %s15, 7
    %p33 = por %p31, %p32
    %p34 = scmp.ne.s32.totalorder %s23, %s24
    %p35 = scmp.eq.s32.totalorder %s15, 0
    %p36 = por %p34, %p35
    %p37 = scmp.ne.s32.totalorder %s23, %s24
    %p38 = scmp.eq.s32.totalorder %s16, 7
    %p39 = por %p37, %p38
    %p41 = scmp.ne.s32.totalorder %s24, %s40
    %p42 = scmp.eq.s32.totalorder %s16, 0
    %p43 = por %p41, %p42
    %s45 = sadd.s32 %s44, 1
    %p48 = scmp.eq.s32.totalorder %s10, 7
    %p49 = scmp.ne.s32.totalorder %s44, %s46
    %p50 = scmp.eq.s32.totalorder %s10, 0
    %p51 = por %p49, %p50
    %p52 = scmp.ne.s32.totalorder %s44, %s46
    %p53 = scmp.eq.s32.totalorder %s15, 7
    %p54 = por %p52, %p53
    %p55 = scmp.ne.s32.totalorder %s46, %s47
    %p56 = scmp.eq.s32.totalorder %s15, 0
    %p57 = por %p55, %p56
    %p58 = scmp.ne.s32.totalorder %s46, %s47
    %p59 = scmp.eq.s32.totalorder %s16, 7
    %p60 = por %p58, %p59
    %p62 = scmp.ne.s32.totalorder %s47, %s61
    %p63 = scmp.eq.s32.totalorder %s16, 0
    %p64 = por %p62, %p63
    %s66 = sadd.s32 %s65, 1
    %p69 = scmp.eq.s32.totalorder %s10, 7
    %p70 = scmp.ne.s32.totalorder %s65, %s67
    %p71 = scmp.eq.s32.totalorder %s10, 0
    %p72 = por %p70, %p71
    %p73 = scmp.ne.s32.totalorder %s65, %s67
    %p74 = scmp.eq.s32.totalorder %s15, 7
    %p75 = por %p73, %p74
    %p76 = scmp.ne.s32.totalorder %s67, %s68
    %p77 = scmp.eq.s32.totalorder %s15, 0
    %p78 = por %p76, %p77
    %p79 = scmp.ne.s32.totalorder %s67, %s68
    %p80 = scmp.eq.s32.totalorder %s16, 7
    %p81 = por %p79, %p80
    %p83 = scmp.ne.s32.totalorder %s68, %s82
    %p84 = scmp.eq.s32.totalorder %s16, 0
    %p85 = por %p83, %p84
    %s87 = sadd.s32 %s86, 1
    %p90 = scmp.eq.s32.totalorder %s10, 7
    %p91 = scmp.ne.s32.totalorder %s86, %s88
    %p92 = scmp.eq.s32.totalorder %s10, 0
    %p93 = por %p91, %p92
    %p94 = scmp.ne.s32.totalorder %s86, %s88
    %p95 = scmp.eq.s32.totalorder %s15, 7
    %p96 = por %p94, %p95
    %p97 = scmp.ne.s32.totalorder %s88, %s89
    %p98 = scmp.eq.s32.totalorder %s15, 0
    %p99 = por %p97, %p98
    %p100 = scmp.ne.s32.totalorder %s88, %s89
    %p101 = scmp.eq.s32.totalorder %s16, 7
    %p102 = por %p100, %p101
    %p104 = scmp.ne.s32.totalorder %s89, %s103
    %p105 = scmp.eq.s32.totalorder %s16, 0
    %p106 = por %p104, %p105
    %s107 = ssub.s32 %s10, %s17
    %p108 = scmp.eq.s32.totalorder %s107, 0
    %s110 = sadd.s32 %s109, 1
    %s111 = scalar_select %p108, %s109, %s110
    %p114 = pneg %p108
    %p115 = scmp.eq.s32.totalorder %s10, 7
    %p116 = por %p114, %p115
    %p117 = scmp.ne.s32.totalorder %s109, %s112
    %p118 = scmp.eq.s32.totalorder %s10, 0
    %p119 = por %p117, %p118
    %p120 = scmp.ne.s32.totalorder %s109, %s112
    %p121 = scmp.eq.s32.totalorder %s15, 7
    %p122 = por %p120, %p121
    %p123 = scmp.ne.s32.totalorder %s112, %s113
    %p124 = scmp.eq.s32.totalorder %s15, 0
    %p125 = por %p123, %p124
    %p126 = scmp.ne.s32.totalorder %s112, %s113
    %p127 = scmp.eq.s32.totalorder %s16, 7
    %p128 = por %p126, %p127
    %p130 = scmp.ne.s32.totalorder %s113, %s129
    %p131 = scmp.eq.s32.totalorder %s16, 0
    %p132 = por %p130, %p131
    %p133 = scmp.le.s32.totalorder 1, %s10
    %p134 = scmp.lt.s32.totalorder %s10, 9
    %p135 = pnand %p133, %p134
    %p136 = pneg %p135
    // Predicated region
    $region9: #{tpu_custom_call.1} parent=5 // pred_check
      _
    $region10: #{tpu_custom_call.1} parent=5 // pred_check_branch
      %138 = sbr.rel (%p135) target = $region12
    $region11: #{tpu_custom_call.1} parent=5 // pred_region
      %s139 = ssub.s32 %s10, 1
      // Predicated region
      $region13: #{tpu_custom_call.1} parent=11 // pred_check
        %p140 = pneg %p57
      $region14: #{tpu_custom_call.1} parent=11 // pred_check_branch
        %142 = sbr.rel (%p140) target = $region16
      $region15: #{tpu_custom_call.1} parent=11 // pred_region
        _
      $region16: #{tpu_custom_call.1} parent=11 // pred_fallthru
        _
      // Predicated region
      $region17: #{tpu_custom_call.1} parent=11 // pred_check
        %p143 = pneg %p78
      $region18: #{tpu_custom_call.1} parent=11 // pred_check_branch
        %145 = sbr.rel (%p143) target = $region20
      $region19: #{tpu_custom_call.1} parent=11 // pred_region
        _
      $region20: #{tpu_custom_call.1} parent=11 // pred_fallthru
        _
      // Predicated region
      $region21: #{tpu_custom_call.1} parent=11 // pred_check
        %p146 = pneg %p99
      $region22: #{tpu_custom_call.1} parent=11 // pred_check_branch
        %148 = sbr.rel (%p146) target = $region24
      $region23: #{tpu_custom_call.1} parent=11 // pred_region
        _
      $region24: #{tpu_custom_call.1} parent=11 // pred_fallthru
        _
    $region12: #{tpu_custom_call.1} parent=5 // pred_fallthru
      _
    %p149 = scmp.lt.s32.totalorder %s10, 8
    // Predicated region
    $region25: #{tpu_custom_call.1} parent=5 // pred_check
      %p150 = pneg %p149
    $region26: #{tpu_custom_call.1} parent=5 // pred_check_branch
      %152 = sbr.rel (%p150) target = $region28
    $region27: #{tpu_custom_call.1} parent=5 // pred_region
      // Predicated region
      $region29: #{tpu_custom_call.1} parent=27 // pred_check
        %p153 = pneg %p30
      $region30: #{tpu_custom_call.1} parent=27 // pred_check_branch
        %155 = sbr.rel (%p153) target = $region32
      $region31: #{tpu_custom_call.1} parent=27 // pred_region
        %s156 = smul.u32 32, %s10
        %p157 = scmp.lt.s32.totalorder %s156, 255
        %s158 = scalar_select %p157, %s156, 255
        %s159 = smul.addr %s158, 4
        %s160 = scalar_lea.vmem %s0, %s159
        %s161 = smul.u32 32, %s10
      $region32: #{tpu_custom_call.1} parent=27 // pred_fallthru
        _
    $region28: #{tpu_custom_call.1} parent=5 // pred_fallthru
      _
    %p162 = scmp.le.s32.totalorder 1, %s10
    %p163 = scmp.lt.s32.totalorder %s10, 9
    %p164 = pnand %p162, %p163
    %p165 = pneg %p164
    // Predicated region
    $region33: #{tpu_custom_call.1} parent=5 // pred_check
      _
    $region34: #{tpu_custom_call.1} parent=5 // pred_check_branch
      %167 = sbr.rel (%p164) target = $region36
    $region35: #{tpu_custom_call.1} parent=5 // pred_region
      %s168 = ssub.s32 %s10, 1
      %s169 = smul.u32 32, %s15
      %p170 = scmp.lt.s32.totalorder %s169, 255
      %s171 = scalar_select %p170, %s169, 255
      %s172 = smul.addr %s171, 4
      %s173 = scalar_lea.vmem %s0, %s172
      %p174 = pneg %p36
      %p175 = pneg %p33
      %p176 = pneg %p57
      %p177 = pneg %p54
      %p178 = pneg %p78
      %p179 = pneg %p75
      %p180 = pneg %p99
      %p181 = pneg %p96
      %p182 = pneg %p125
      %p183 = pneg %p122
      %s184 = smul.u32 32, %s15
      %p185 = scmp.lt.s32.totalorder %s184, 255
      %s186 = scalar_select %p185, %s184, 255
      %s187 = smul.addr %s186, 8
      %s188 = scalar_lea.vmem %s4, %s187
      %s189 = smul.u32 32, %s15
      %p190 = scmp.lt.s32.totalorder %s189, 255
      %s191 = scalar_select %p190, %s189, 255
      %s192 = smul.addr %s191, 4
      %s193 = scalar_lea.vmem %s0, %s192
      %s194 = smul.u32 32, %s15
      %s195 = smul.u32 32, %s15
      %p196 = scmp.lt.s32.totalorder %s195, 255
      %s197 = scalar_select %p196, %s195, 255
      %s198 = smul.addr %s197, 8
      %s199 = scalar_lea.vmem %s4, %s198
      %s200 = smul.u32 32, %s15
      %v202 = vld [vmem:[%s193] sm:$0xf]
      %v203 = vld [vmem:[%s193 + $0x4] sm:$0xf]
      %v204 = vld [vmem:[%s193 + $0x8] sm:$0xf]
      %v205 = vld [vmem:[%s193 + $0xc] sm:$0xf]
      %v206 = vld [vmem:[%s193 + $0x10] sm:$0xf]
      %v207 = vld [vmem:[%s193 + $0x14] sm:$0xf]
      %v208 = vld [vmem:[%s193 + $0x18] sm:$0xf]
      %v209 = vld [vmem:[%s193 + $0x1c] sm:$0xf]
      %v210 = vld [vmem:[%s193 + $0x20] sm:$0xf]
      %v211 = vld [vmem:[%s193 + $0x24] sm:$0xf]
      %v212 = vld [vmem:[%s193 + $0x28] sm:$0xf]
      %v213 = vld [vmem:[%s193 + $0x2c] sm:$0xf]
      %v214 = vld [vmem:[%s193 + $0x30] sm:$0xf]
      %v215 = vld [vmem:[%s193 + $0x34] sm:$0xf]
      %v216 = vld [vmem:[%s193 + $0x38] sm:$0xf]
      %v217 = vld [vmem:[%s193 + $0x3c] sm:$0xf]
      %v218 = vld [vmem:[%s193 + $0x40] sm:$0xf]
      %v219 = vld [vmem:[%s193 + $0x44] sm:$0xf]
      %v220 = vld [vmem:[%s193 + $0x48] sm:$0xf]
      %v221 = vld [vmem:[%s193 + $0x4c] sm:$0xf]
      %v222 = vld [vmem:[%s193 + $0x50] sm:$0xf]
      %v223 = vld [vmem:[%s193 + $0x54] sm:$0xf]
      %v224 = vld [vmem:[%s193 + $0x58] sm:$0xf]
      %v225 = vld [vmem:[%s193 + $0x5c] sm:$0xf]
      %v226 = vld [vmem:[%s193 + $0x60] sm:$0xf]
      %v227 = vld [vmem:[%s193 + $0x64] sm:$0xf]
      %v228 = vld [vmem:[%s193 + $0x68] sm:$0xf]
      %v229 = vld [vmem:[%s193 + $0x6c] sm:$0xf]
      %v230 = vld [vmem:[%s193 + $0x70] sm:$0xf]
      %v231 = vld [vmem:[%s193 + $0x74] sm:$0xf]
      %v232 = vld [vmem:[%s193 + $0x78] sm:$0xf]
      %v233 = vld [vmem:[%s193 + $0x7c] sm:$0xf]
      %v234 = vld [vmem:[%s1] sm:$0xf]
      %v235 = vld [vmem:[%s1 + $0x4] sm:$0xf]
      %v236 = vld [vmem:[%s1 + $0x8] sm:$0xf]
      %v237 = vld [vmem:[%s1 + $0xc] sm:$0x3]
      %v270 = vunpack.c.l.b16 %v202
      %v271 = vunpack.c.l.b16 %v203
      %v272 = vunpack.c.l.b16 %v204
      %v273 = vunpack.c.l.b16 %v205
      %v274 = vunpack.c.l.b16 %v206
      %v275 = vunpack.c.l.b16 %v207
      %v276 = vunpack.c.l.b16 %v208
      %v277 = vunpack.c.l.b16 %v209
      %v278 = vunpack.c.l.b16 %v210
      %v279 = vunpack.c.l.b16 %v211
      %v280 = vunpack.c.l.b16 %v212
      %v281 = vunpack.c.l.b16 %v213
      %v282 = vunpack.c.l.b16 %v214
      %v283 = vunpack.c.l.b16 %v215
      %v284 = vunpack.c.l.b16 %v216
      %v285 = vunpack.c.l.b16 %v217
      %v286 = vunpack.c.l.b16 %v218
      %v287 = vunpack.c.l.b16 %v219
      %v288 = vunpack.c.l.b16 %v220
      %v289 = vunpack.c.l.b16 %v221
      %v290 = vunpack.c.l.b16 %v222
      %v291 = vunpack.c.l.b16 %v223
      %v292 = vunpack.c.l.b16 %v224
      %v293 = vunpack.c.l.b16 %v225
      %v294 = vunpack.c.l.b16 %v226
      %v295 = vunpack.c.l.b16 %v227
      %v296 = vunpack.c.l.b16 %v228
      %v297 = vunpack.c.l.b16 %v229
      %v298 = vunpack.c.l.b16 %v230
      %v299 = vunpack.c.l.b16 %v231
      %v300 = vunpack.c.l.b16 %v232
      %v301 = vunpack.c.l.b16 %v233
      %v302 = vpack.c.b16 %v271, %v270
      %v303 = vpack.c.b16 %v273, %v272
      %v304 = vpack.c.b16 %v275, %v274
      %v305 = vpack.c.b16 %v277, %v276
      %v306 = vpack.c.b16 %v279, %v278
      %v307 = vpack.c.b16 %v281, %v280
      %v308 = vpack.c.b16 %v283, %v282
      %v309 = vpack.c.b16 %v285, %v284
      %v310 = vpack.c.b16 %v287, %v286
      %v311 = vpack.c.b16 %v289, %v288
      %v312 = vpack.c.b16 %v291, %v290
      %v313 = vpack.c.b16 %v293, %v292
      %v314 = vpack.c.b16 %v295, %v294
      %v315 = vpack.c.b16 %v297, %v296
      %v316 = vpack.c.b16 %v299, %v298
      %v317 = vpack.c.b16 %v301, %v300
      %v322 = vunpack.c.l.b16 %v234
      %v323 = vunpack.c.l.b16 %v235
      %v324 = vunpack.c.l.b16 %v236
      %v325 = vunpack.c.l.b16 %v237
      %v326 = vpack.c.b16 %v323, %v322
      %v327 = vpack.c.b16 %v325, %v324
      %vm329 = vcmask 220160
      %v331 = vsel %vm329, %v302, 0
      %v334 = vsel %vm329, %v303, 0
      %v337 = vsel %vm329, %v304, 0
      %v340 = vsel %vm329, %v305, 0
      %v343 = vsel %vm329, %v306, 0
      %v346 = vsel %vm329, %v307, 0
      %v349 = vsel %vm329, %v308, 0
      %v352 = vsel %vm329, %v309, 0
      %v355 = vsel %vm329, %v310, 0
      %v358 = vsel %vm329, %v311, 0
      %v361 = vsel %vm329, %v312, 0
      %v364 = vsel %vm329, %v313, 0
      %v367 = vsel %vm329, %v314, 0
      %v370 = vsel %vm329, %v315, 0
      %v373 = vsel %vm329, %v316, 0
      %v376 = vsel %vm329, %v317, 0
      %vm378 = vcmask 1044480
      %vm379 = vcmask 1045504
      %v380 = vsel %vm378, 4294967295, 65535
      %v381 = vsel %vm379, %v380, 0
      %v383 = vand.u32 %v327, %v381
      %385 = vmatpush.bf16.msra.mxu0 0
      %386 = vmatpush.bf16.msra.mxu0 0
      %387 = vmatpush.bf16.msra.mxu0 0
      %388 = vmatpush.bf16.msra.mxu0 0
      %389 = vmatpush.bf16.msra.mxu0 0
      %390 = vmatpush.bf16.msra.mxu0 0
      %391 = vmatpush.bf16.msra.mxu0 %v383
      %392 = vmatpush.bf16.msra.mxu0 %v326
      %393 = vmatmul.bf16.gmra.mxu0 %v331
      %v394 = vpop.f32.mrf.mxu0
      %v395 = vadd.f32 0.0, %v394
      %v396 = vpop.f32.mrf.mxu0
      %v397 = vadd.f32 0.0, %v396
      %398 = vmatmul.bf16.gmra.mxu0 %v334
      %v399 = vpop.f32.mrf.mxu0
      %v400 = vadd.f32 0.0, %v399
      %v401 = vpop.f32.mrf.mxu0
      %v402 = vadd.f32 0.0, %v401
      %403 = vmatmul.bf16.gmra.mxu0 %v337
      %v404 = vpop.f32.mrf.mxu0
      %v405 = vadd.f32 0.0, %v404
      %v406 = vpop.f32.mrf.mxu0
      %v407 = vadd.f32 0.0, %v406
      %408 = vmatmul.bf16.gmra.mxu0 %v340
      %v409 = vpop.f32.mrf.mxu0
      %v410 = vadd.f32 0.0, %v409
      %v411 = vpop.f32.mrf.mxu0
      %v412 = vadd.f32 0.0, %v411
      %413 = vmatmul.bf16.gmra.mxu0 %v343
      %v414 = vpop.f32.mrf.mxu0
      %v415 = vadd.f32 0.0, %v414
      %v416 = vpop.f32.mrf.mxu0
      %v417 = vadd.f32 0.0, %v416
      %418 = vmatmul.bf16.gmra.mxu0 %v346
      %v419 = vpop.f32.mrf.mxu0
      %v420 = vadd.f32 0.0, %v419
      %v421 = vpop.f32.mrf.mxu0
      %v422 = vadd.f32 0.0, %v421
      %423 = vmatmul.bf16.gmra.mxu0 %v349
      %v424 = vpop.f32.mrf.mxu0
      %v425 = vadd.f32 0.0, %v424
      %v426 = vpop.f32.mrf.mxu0
      %v427 = vadd.f32 0.0, %v426
      %428 = vmatmul.bf16.gmra.mxu0 %v352
      %v429 = vpop.f32.mrf.mxu0
      %v430 = vadd.f32 0.0, %v429
      %v431 = vpop.f32.mrf.mxu0
      %v432 = vadd.f32 0.0, %v431
      %433 = vmatmul.bf16.gmra.mxu0 %v355
      %v434 = vpop.f32.mrf.mxu0
      %v435 = vadd.f32 0.0, %v434
      %v436 = vpop.f32.mrf.mxu0
      %v437 = vadd.f32 0.0, %v436
      %438 = vmatmul.bf16.gmra.mxu0 %v358
      %v439 = vpop.f32.mrf.mxu0
      %v440 = vadd.f32 0.0, %v439
      %v441 = vpop.f32.mrf.mxu0
      %v442 = vadd.f32 0.0, %v441
      %443 = vmatmul.bf16.gmra.mxu0 %v361
      %v444 = vpop.f32.mrf.mxu0
      %v445 = vadd.f32 0.0, %v444
      %v446 = vpop.f32.mrf.mxu0
      %v447 = vadd.f32 0.0, %v446
      %448 = vmatmul.bf16.gmra.mxu0 %v364
      %v449 = vpop.f32.mrf.mxu0
      %v450 = vadd.f32 0.0, %v449
      %v451 = vpop.f32.mrf.mxu0
      %v452 = vadd.f32 0.0, %v451
      %453 = vmatmul.bf16.gmra.mxu0 %v367
      %v454 = vpop.f32.mrf.mxu0
      %v455 = vadd.f32 0.0, %v454
      %v456 = vpop.f32.mrf.mxu0
      %v457 = vadd.f32 0.0, %v456
      %458 = vmatmul.bf16.gmra.mxu0 %v370
      %v459 = vpop.f32.mrf.mxu0
      %v460 = vadd.f32 0.0, %v459
      %v461 = vpop.f32.mrf.mxu0
      %v462 = vadd.f32 0.0, %v461
      %463 = vmatmul.bf16.gmra.mxu0 %v373
      %v464 = vpop.f32.mrf.mxu0
      %v465 = vadd.f32 0.0, %v464
      %v466 = vpop.f32.mrf.mxu0
      %v467 = vadd.f32 0.0, %v466
      %468 = vmatmul.bf16.gmra.mxu0 %v376
      %v469 = vpop.f32.mrf.mxu0
      %v470 = vadd.f32 0.0, %v469
      %v471 = vpop.f32.mrf.mxu0
      %v472 = vadd.f32 0.0, %v471
      %473 = vdwg.mxu0
      %v474 = vld [vmem:[%s2] sm:$0x1]
      %v476 = vperm.slane %v474, 0
      %v478 = vmul.f32 %v395, %v476
      %v479 = vmul.f32 %v397, %v476
      %v480 = vmul.f32 %v400, %v476
      %v481 = vmul.f32 %v402, %v476
      %v482 = vmul.f32 %v405, %v476
      %v483 = vmul.f32 %v407, %v476
      %v484 = vmul.f32 %v410, %v476
      %v485 = vmul.f32 %v412, %v476
      %v486 = vmul.f32 %v415, %v476
      %v487 = vmul.f32 %v417, %v476
      %v488 = vmul.f32 %v420, %v476
      %v489 = vmul.f32 %v422, %v476
      %v490 = vmul.f32 %v425, %v476
      %v491 = vmul.f32 %v427, %v476
      %v492 = vmul.f32 %v430, %v476
      %v493 = vmul.f32 %v432, %v476
      %v494 = vmul.f32 %v435, %v476
      %v495 = vmul.f32 %v437, %v476
      %v496 = vmul.f32 %v440, %v476
      %v497 = vmul.f32 %v442, %v476
      %v498 = vmul.f32 %v445, %v476
      %v499 = vmul.f32 %v447, %v476
      %v500 = vmul.f32 %v450, %v476
      %v501 = vmul.f32 %v452, %v476
      %v502 = vmul.f32 %v455, %v476
      %v503 = vmul.f32 %v457, %v476
      %v504 = vmul.f32 %v460, %v476
      %v505 = vmul.f32 %v462, %v476
      %v506 = vmul.f32 %v465, %v476
      %v507 = vmul.f32 %v467, %v476
      %v508 = vmul.f32 %v470, %v476
      %v509 = vmul.f32 %v472, %v476
      %v510 = vld [vmem:[%s3] sm:$0x1]
      %v512 = vperm.slane %v510, 0
      %v514 = vadd.f32 %v478, %v512
      %v515 = vadd.f32 %v479, %v512
      %v516 = vadd.f32 %v480, %v512
      %v517 = vadd.f32 %v481, %v512
      %v518 = vadd.f32 %v482, %v512
      %v519 = vadd.f32 %v483, %v512
      %v520 = vadd.f32 %v484, %v512
      %v521 = vadd.f32 %v485, %v512
      %v522 = vadd.f32 %v486, %v512
      %v523 = vadd.f32 %v487, %v512
      %v524 = vadd.f32 %v488, %v512
      %v525 = vadd.f32 %v489, %v512
      %v526 = vadd.f32 %v490, %v512
      %v527 = vadd.f32 %v491, %v512
      %v528 = vadd.f32 %v492, %v512
      %v529 = vadd.f32 %v493, %v512
      %v530 = vadd.f32 %v494, %v512
      %v531 = vadd.f32 %v495, %v512
      %v532 = vadd.f32 %v496, %v512
      %v533 = vadd.f32 %v497, %v512
      %v534 = vadd.f32 %v498, %v512
      %v535 = vadd.f32 %v499, %v512
      %v536 = vadd.f32 %v500, %v512
      %v537 = vadd.f32 %v501, %v512
      %v538 = vadd.f32 %v502, %v512
      %v539 = vadd.f32 %v503, %v512
      %v540 = vadd.f32 %v504, %v512
      %v541 = vadd.f32 %v505, %v512
      %v542 = vadd.f32 %v506, %v512
      %v543 = vadd.f32 %v507, %v512
      %v544 = vadd.f32 %v508, %v512
      %v545 = vadd.f32 %v509, %v512
      %v546 = vmax.f32 %v514, 0.0
      %v547 = vmax.f32 %v515, 0.0
      %v548 = vmax.f32 %v516, 0.0
      %v549 = vmax.f32 %v517, 0.0
      %v550 = vmax.f32 %v518, 0.0
      %v551 = vmax.f32 %v519, 0.0
      %v552 = vmax.f32 %v520, 0.0
      %v553 = vmax.f32 %v521, 0.0
      %v554 = vmax.f32 %v522, 0.0
      %v555 = vmax.f32 %v523, 0.0
      %v556 = vmax.f32 %v524, 0.0
      %v557 = vmax.f32 %v525, 0.0
      %v558 = vmax.f32 %v526, 0.0
      %v559 = vmax.f32 %v527, 0.0
      %v560 = vmax.f32 %v528, 0.0
      %v561 = vmax.f32 %v529, 0.0
      %v562 = vmax.f32 %v530, 0.0
      %v563 = vmax.f32 %v531, 0.0
      %v564 = vmax.f32 %v532, 0.0
      %v565 = vmax.f32 %v533, 0.0
      %v566 = vmax.f32 %v534, 0.0
      %v567 = vmax.f32 %v535, 0.0
      %v568 = vmax.f32 %v536, 0.0
      %v569 = vmax.f32 %v537, 0.0
      %v570 = vmax.f32 %v538, 0.0
      %v571 = vmax.f32 %v539, 0.0
      %v572 = vmax.f32 %v540, 0.0
      %v573 = vmax.f32 %v541, 0.0
      %v574 = vmax.f32 %v542, 0.0
      %v575 = vmax.f32 %v543, 0.0
      %v576 = vmax.f32 %v544, 0.0
      %v577 = vmax.f32 %v545, 0.0
      %vm578 = vcmask 523264
      %579 = vst.msk [vmem:[%s199] sm:$0xff] %vm578, %v546
      %580 = vst.msk [vmem:[%s199 + $0x8] sm:$0xff] %vm578, %v547
      %581 = vst.msk [vmem:[%s199 + $0x10] sm:$0xff] %vm578, %v548
      %582 = vst.msk [vmem:[%s199 + $0x18] sm:$0xff] %vm578, %v549
      %583 = vst.msk [vmem:[%s199 + $0x20] sm:$0xff] %vm578, %v550
      %584 = vst.msk [vmem:[%s199 + $0x28] sm:$0xff] %vm578, %v551
      %585 = vst.msk [vmem:[%s199 + $0x30] sm:$0xff] %vm578, %v552
      %586 = vst.msk [vmem:[%s199 + $0x38] sm:$0xff] %vm578, %v553
      %587 = vst.msk [vmem:[%s199 + $0x40] sm:$0xff] %vm578, %v554
      %588 = vst.msk [vmem:[%s199 + $0x48] sm:$0xff] %vm578, %v555
      %589 = vst.msk [vmem:[%s199 + $0x50] sm:$0xff] %vm578, %v556
      %590 = vst.msk [vmem:[%s199 + $0x58] sm:$0xff] %vm578, %v557
      %591 = vst.msk [vmem:[%s199 + $0x60] sm:$0xff] %vm578, %v558
      %592 = vst.msk [vmem:[%s199 + $0x68] sm:$0xff] %vm578, %v559
      %593 = vst.msk [vmem:[%s199 + $0x70] sm:$0xff] %vm578, %v560
      %594 = vst.msk [vmem:[%s199 + $0x78] sm:$0xff] %vm578, %v561
      %595 = vst.msk [vmem:[%s199 + $0x80] sm:$0xff] %vm578, %v562
      %596 = vst.msk [vmem:[%s199 + $0x88] sm:$0xff] %vm578, %v563
      %597 = vst.msk [vmem:[%s199 + $0x90] sm:$0xff] %vm578, %v564
      %598 = vst.msk [vmem:[%s199 + $0x98] sm:$0xff] %vm578, %v565
      %599 = vst.msk [vmem:[%s199 + $0xa0] sm:$0xff] %vm578, %v566
      %600 = vst.msk [vmem:[%s199 + $0xa8] sm:$0xff] %vm578, %v567
      %601 = vst.msk [vmem:[%s199 + $0xb0] sm:$0xff] %vm578, %v568
      %602 = vst.msk [vmem:[%s199 + $0xb8] sm:$0xff] %vm578, %v569
      %603 = vst.msk [vmem:[%s199 + $0xc0] sm:$0xff] %vm578, %v570
      %604 = vst.msk [vmem:[%s199 + $0xc8] sm:$0xff] %vm578, %v571
      %605 = vst.msk [vmem:[%s199 + $0xd0] sm:$0xff] %vm578, %v572
      %606 = vst.msk [vmem:[%s199 + $0xd8] sm:$0xff] %vm578, %v573
      %607 = vst.msk [vmem:[%s199 + $0xe0] sm:$0xff] %vm578, %v574
      %608 = vst.msk [vmem:[%s199 + $0xe8] sm:$0xff] %vm578, %v575
      %609 = vst.msk [vmem:[%s199 + $0xf0] sm:$0xff] %vm578, %v576
      %610 = vst.msk [vmem:[%s199 + $0xf8] sm:$0xff] %vm578, %v577
      %s611 = smul.u32 32, %s15
      %p612 = scmp.lt.s32.totalorder %s611, 255
      %s613 = scalar_select %p612, %s611, 255
      %s614 = smul.addr %s613, 8
      %s615 = scalar_lea.vmem %s4, %s614
      // Predicated region
      $region37: #{tpu_custom_call.1} parent=35 // pred_check
        %p616 = pneg %p122
      $region38: #{tpu_custom_call.1} parent=35 // pred_check_branch
        %618 = sbr.rel (%p616) target = $region40
      $region39: #{tpu_custom_call.1} parent=35 // pred_region
        %s619 = smul.u32 32, %s15
      $region40: #{tpu_custom_call.1} parent=35 // pred_fallthru
        _
    $region36: #{tpu_custom_call.1} parent=5 // pred_fallthru
      _
    %p620 = scmp.le.s32.totalorder 2, %s10
    // Predicated region
    $region41: #{tpu_custom_call.1} parent=5 // pred_check
      %p621 = pneg %p620
    $region42: #{tpu_custom_call.1} parent=5 // pred_check_branch
      %623 = sbr.rel (%p621) target = $region44
    $region43: #{tpu_custom_call.1} parent=5 // pred_region
      %s624 = ssub.s32 %s10, 2
      // Predicated region
      $region45: #{tpu_custom_call.1} parent=43 // pred_check
        %p625 = pneg %p128
      $region46: #{tpu_custom_call.1} parent=43 // pred_check_branch
        %627 = sbr.rel (%p625) target = $region48
      $region47: #{tpu_custom_call.1} parent=43 // pred_region
        %s628 = smul.u32 32, %s16
        %p629 = scmp.lt.s32.totalorder %s628, 255
        %s630 = scalar_select %p629, %s628, 255
        %s631 = smul.addr %s630, 8
        %s632 = scalar_lea.vmem %s4, %s631
      $region48: #{tpu_custom_call.1} parent=43 // pred_fallthru
        _
    $region44: #{tpu_custom_call.1} parent=5 // pred_fallthru
      _
  $region6: #{tpu_custom_call.1} parent=0 // loop_footer
    %s14 = sadd.s32 1, %s10
  $region7: #{tpu_custom_call.1} parent=0 // loop_footer_branch
    %9 = sbr.rel target = $region3
  $region8: #{tpu_custom_call.1} parent=0 // loop_exit
    _

</llo_original>
